<compile_context>
chip_gen: v6e
topology: v6e:2x2x1
jax: 0.10.0
libtpu: 0.0.40
codegen_flags: <defaults>
</compile_context>

<pallas_src>
import functools

import jax
import jax.numpy as jnp
from jax.experimental import pallas as pl
from jax.experimental.pallas import tpu as pltpu

# One streamed block (input or output).  2 in + 2 out double-buffered blocks
# = 4x this (~16 MiB), leaving headroom under the scoped-VMEM limit below.
_BLOCK_BUDGET_BYTES = 4 * 1024 * 1024
_VMEM_LIMIT_BYTES = 32 * 1024 * 1024
# Keep the fused (rows, 2) scale/bias table fully VMEM-resident while its
# lane-padded footprint is tiny; otherwise fall back to per-row-block DMA.
_MAX_RESIDENT_PARAM_ROWS = 2048


def _round_up(x, m):
    return ((x + m - 1) // m) * m


def _norm_rowparams_kernel(params_ref, img_ref, out_ref, *, row_tile, resident):
    # Layout A: rows = N*C on sublanes, pixels on lanes.
    # params_ref: (rows_padded, 2) f32 if resident else (row_tile, 2) f32
    #             column 0 = 1/std, column 1 = -mean/std for that row.
    if resident:
        r0 = pl.multiple_of(pl.program_id(0) * row_tile, row_tile)
        p = params_ref[pl.ds(r0, row_tile), :]          # (row_tile, 2)
    else:
        p = params_ref[...]                             # (row_tile, 2)
    scale = p[:, 0:1]                                   # broadcasts over lanes
    bias = p[:, 1:2]
    x = img_ref[...].astype(jnp.float32)
    out_ref[...] = (x * scale + bias).astype(out_ref.dtype)


def _norm_laneparams_kernel(params_ref, img_ref, out_ref):
    # Layout B: rows = N on sublanes, lanes = C*H*W.
    # params_ref: (2, hw_tile) f32 block; row 0 = 1/std, row 1 = -mean/std,
    #             already expanded per pixel along the lane axis.
    scale = params_ref[0:1, :]                          # broadcasts over rows
    bias = params_ref[1:2, :]
    x = img_ref[...].astype(jnp.float32)
    out_ref[...] = (x * scale + bias).astype(out_ref.dtype)


def _pick_tiles(rows, lanes, itemsize):
    """Lane/sublane-dense tiles targeting ~4 MiB blocks, >=2 blocks if possible."""
    # Dtype-aware sublane packing: f32 -> 8, bf16 -> 16, int8/fp8 -> 32.
    sub_pack = max(8, 32 // itemsize)

    # Lane-dense first (unmasked stores are the biggest lever), then fill rows
    # up to the block budget, then regrow lanes if rows were exhausted
    # (small N*C with huge images).
    hw_tile = min(_round_up(lanes, 128), 4096)
    budget_rows = max(
        sub_pack, (_BLOCK_BUDGET_BYTES // (hw_tile * itemsize)) // sub_pack * sub_pack)
    row_tile = min(_round_up(rows, sub_pack), budget_rows)
    budget_lanes = max(
        128, (_BLOCK_BUDGET_BYTES // (row_tile * itemsize)) // 128 * 128)
    hw_tile = min(_round_up(lanes, 128), budget_lanes)

    # Guarantee >= 2 blocks along one "parallel" axis so both v7x TensorCores
    # get work even when the whole problem fits in a single block.
    if pl.cdiv(rows, row_tile) * pl.cdiv(lanes, hw_tile) < 2:
        if rows > sub_pack:
            row_tile = _round_up(pl.cdiv(rows, 2), sub_pack)
        elif lanes > 128:
            hw_tile = _round_up(pl.cdiv(lanes, 2), 128)
    return row_tile, hw_tile


def normalization_forward(img, mean, std):
    """img: (N, C, H, W); mean, std: (C,).  Returns (img - mean) / std."""
    N, C, H, W = img.shape
    hw = H * W

    # Tiny per-channel affine params in f32: (x - mean)/std == x*(1/std) + (-mean/std).
    mean_f = jnp.asarray(mean, jnp.float32).reshape(C)
    std_f = jnp.asarray(std, jnp.float32).reshape(C)
    scale = 1.0 / std_f
    bias = -mean_f * scale

    # Float images keep their dtype (bandwidth); everything else promotes to f32
    # (closer to PyTorch, which promotes integer images to float).
    out_dtype = img.dtype if jnp.issubdtype(img.dtype, jnp.floating) else jnp.float32
    itemsize = max(jnp.dtype(img.dtype).itemsize, jnp.dtype(out_dtype).itemsize)

    cparams = pltpu.CompilerParams(
        dimension_semantics=("parallel", "parallel"),
        vmem_limit_bytes=_VMEM_LIMIT_BYTES,
    )

    if hw % 128 == 0:
        # ---- Layout A: (N*C, H*W) — pixels are already lane-aligned. --------
        rows, lanes = N * C, hw
        img2d = img.reshape(rows, lanes)
        row_tile, hw_tile = _pick_tiles(rows, lanes, itemsize)
        n_row_blocks = pl.cdiv(rows, row_tile)
        n_lane_blocks = pl.cdiv(lanes, hw_tile)
        rows_padded = n_row_blocks * row_tile

        # Fused per-row affine table (scale, bias), padded with identity rows so
        # the padded tail of the last row-block computes harmless values.
        params = jnp.stack([jnp.tile(scale, (N,)), jnp.tile(bias, (N,))], axis=1)
        if rows_padded > rows:
            pad = jnp.concatenate(
                [jnp.ones((rows_padded - rows, 1), jnp.float32),
                 jnp.zeros((rows_padded - rows, 1), jnp.float32)], axis=1)
            params = jnp.concatenate([params, pad], axis=0)

        resident = rows_padded <= _MAX_RESIDENT_PARAM_ROWS
        if resident:
            # Whole table as one constant-index block: DMA'd into VMEM once and
            # never refetched; the kernel slices its row window with pl.ds.
            params_spec = pl.BlockSpec((rows_padded, 2), lambda i, j: (0, 0))
        else:
            # Fallback for very large N*C: one small fused DMA per row-block
            # (index depends only on i, so it is not refetched across j).
            params_spec = pl.BlockSpec((row_tile, 2), lambda i, j: (i, 0))

        kernel = functools.partial(
            _norm_rowparams_kernel, row_tile=row_tile, resident=resident)
        # Note: if profiling on v7x shows exposed DMA latency at small hw_tile,
        # add pipeline_mode=pl.Buffered(3) to the image BlockSpec below.
        out2d = pl.pallas_call(
            kernel,
            out_shape=jax.ShapeDtypeStruct((rows, lanes), out_dtype),
            grid_spec=pltpu.PrefetchScalarGridSpec(
                num_scalar_prefetch=0,
                grid=(n_row_blocks, n_lane_blocks),
                in_specs=[
                    params_spec,
                    pl.BlockSpec((row_tile, hw_tile), lambda i, j: (i, j)),
                ],
                out_specs=pl.BlockSpec((row_tile, hw_tile), lambda i, j: (i, j)),
            ),
            compiler_params=cparams,
        )(params, img2d)
    else:
        # ---- Layout B: (N, C*H*W) — for H*W not a multiple of 128. ----------
        # Folding C into the lane axis keeps output stores lane-dense for
        # typical CNN spatial sizes (28x28, 7x7, ...) instead of masking every
        # H*W-wide row.
        rows, lanes = N, C * hw
        img2d = img.reshape(rows, lanes)
        row_tile, hw_tile = _pick_tiles(rows, lanes, itemsize)

        # Per-pixel affine params along the lane axis, fused into one array.
        params = jnp.stack([jnp.repeat(scale, hw), jnp.repeat(bias, hw)], axis=0)

        out2d = pl.pallas_call(
            _norm_laneparams_kernel,
            out_shape=jax.ShapeDtypeStruct((rows, lanes), out_dtype),
            grid_spec=pltpu.PrefetchScalarGridSpec(
                num_scalar_prefetch=0,
                grid=(pl.cdiv(rows, row_tile), pl.cdiv(lanes, hw_tile)),
                in_specs=[
                    pl.BlockSpec((2, hw_tile), lambda i, j: (0, j)),
                    pl.BlockSpec((row_tile, hw_tile), lambda i, j: (i, j)),
                ],
                out_specs=pl.BlockSpec((row_tile, hw_tile), lambda i, j: (i, j)),
            ),
            compiler_params=cparams,
        )(params, img2d)

    return out2d.reshape(N, C, H, W)


if __name__ == "__main__":
    key = jax.random.PRNGKey(0)
    k1, k2 = jax.random.split(key)

    # Case 1: lane-aligned spatial size (H*W multiple of 128) -> layout A.
    N, C, H, W = 2, 4, 16, 16
    img = jax.random.normal(k1, (N, C, H, W), dtype=jnp.float32)
    mean = jnp.linspace(0.1, 0.5, C, dtype=jnp.float32)
    std = jnp.linspace(0.2, 0.3, C, dtype=jnp.float32)
    out = jax.block_until_ready(normalization_forward(img, mean, std))
    ref = (img - mean.reshape(-1, 1, 1)) / std.reshape(-1, 1, 1)
    assert out.shape == img.shape
    assert jnp.allclose(out, ref, rtol=1e-5, atol=1e-5)

    # Case 2: non-lane-aligned spatial size (28x28) -> layout B.
    N2, C2, H2, W2 = 2, 3, 28, 28
    img2 = jax.random.normal(k2, (N2, C2, H2, W2), dtype=jnp.float32)
    mean2 = jnp.array([0.485, 0.456, 0.406], dtype=jnp.float32)
    std2 = jnp.array([0.229, 0.224, 0.225], dtype=jnp.float32)
    out2 = jax.block_until_ready(normalization_forward(img2, mean2, std2))
    ref2 = (img2 - mean2.reshape(-1, 1, 1)) / std2.reshape(-1, 1, 1)
    assert out2.shape == img2.shape
    assert jnp.allclose(out2, ref2, rtol=1e-5, atol=1e-5)

    print("KERNEL_OK")
</pallas_src>

<mosaic_0001>
module attributes {stable_mosaic.version = 11 : i64} {
  func.func @_norm_rowparams_kernel(%arg0: i32, %arg1: i32, %arg2: memref<8x2xf32, #tpu.memory_space<vmem>>, %arg3: memref<8x128xf32, #tpu.memory_space<vmem>>, %arg4: memref<8x128xf32, #tpu.memory_space<vmem>>) attributes {dimension_semantics = [#tpu.dimension_semantics<parallel>, #tpu.dimension_semantics<parallel>], iteration_bounds = array<i64: 1, 2>, scalar_prefetch = 0 : i64, scratch_operands = 0 : i64, tpu.core_type = #tpu.core_type<tc>, window_params = [{pipeline_mode = #tpu.pipeline_mode<synchronous>, transform_indices = @transform_0, window_bounds = array<i64: 8, 2>}, {transform_indices = @transform_1, window_bounds = array<i64: 8, 128>}, {transform_indices = @transform_2, window_bounds = array<i64: 8, 128>}]} {
    %c8_i32 = arith.constant 8 : i32
    %0 = arith.muli %arg0, %c8_i32 : i32
    %1 = tpu.assume_multiple %0, 8 : i32
    %2 = arith.index_cast %1 : i32 to index
    %c0 = arith.constant 0 : index
    %3 = vector.load %arg2[%2, %c0] : memref<8x2xf32, #tpu.memory_space<vmem>>, vector<8x2xf32>
    %4 = vector.extract_strided_slice %3 {offsets = [0, 0], sizes = [8, 1], strides = [1, 1]} : vector<8x2xf32> to vector<8x1xf32>
    %5 = vector.extract_strided_slice %3 {offsets = [0, 1], sizes = [8, 1], strides = [1, 1]} : vector<8x2xf32> to vector<8x1xf32>
    %c0_0 = arith.constant 0 : index
    %c0_1 = arith.constant 0 : index
    %6 = vector.load %arg3[%c0_0, %c0_1] : memref<8x128xf32, #tpu.memory_space<vmem>>, vector<8x128xf32>
    %7 = vector.broadcast %4 : vector<8x1xf32> to vector<8x128xf32>
    %8 = arith.mulf %6, %7 : vector<8x128xf32>
    %9 = vector.broadcast %5 : vector<8x1xf32> to vector<8x128xf32>
    %10 = arith.addf %8, %9 : vector<8x128xf32>
    %c0_2 = arith.constant 0 : index
    %c0_3 = arith.constant 0 : index
    %11 = vector.load %arg4[%c0_2, %c0_3] : memref<8x128xf32, #tpu.memory_space<vmem>>, vector<8x128xf32>
    tpu.vector_store %arg4[%c0_2, %c0_3], %10 {strides = array<i32>} : memref<8x128xf32, #tpu.memory_space<vmem>>, vector<8x128xf32>,
    return
  }
  func.func @transform_0(%arg0: i32, %arg1: i32) -> (i32, i32) {
    %c0_i32 = arith.constant 0 : i32
    %c0_i32_0 = arith.constant 0 : i32
    %c0_i32_1 = arith.constant 0 : i32
    return %c0_i32, %c0_i32_0 : i32, i32
  }
  func.func @transform_1(%arg0: i32, %arg1: i32) -> (i32, i32) {
    %c0_i32 = arith.constant 0 : i32
    return %arg0, %arg1 : i32, i32
  }
  func.func @transform_2(%arg0: i32, %arg1: i32) -> (i32, i32) {
    %c0_i32 = arith.constant 0 : i32
    return %arg0, %arg1 : i32, i32
  }
}

</mosaic_0001>

<llo_original>
// kernel: tpu_custom_call.1
$region0: #{tpu_custom_call.1}
  #allocation0 [shape = 'u32[]', space=smem, size = 0x4, offset = 0x4, fixed_abs, tag = 'smem constant byte address 0x4 - core index']
  #allocation1 [shape = 'u32[144,128]{1,0:T(1,128)}', space=vmem, size = 0x12000, scoped, tag = 'internal scratch']
  %s0 = inlined_call_operand.vmem [shape: f32[8,2], index: 0, kind: input, shape index: {}]
  %s1 = inlined_call_operand.hbm [shape: f32[8,256], index: 1, kind: input, shape index: {}]
  %s2 = inlined_call_operand.hbm [shape: f32[8,256], index: 2, kind: output, shape index: {}]
  %s3 = sld [smem:[#allocation0]]
  $region45: #{tpu_custom_call.1} parent=0
    _
  %s5 = ssub.s32 1, %s3
  %s6 = scalar_select 0, %s5, %s3
  $region1: #{tpu_custom_call.1} parent=0
    #allocation2 [shape = 'u8[8192]{0}', space=vmem, size = 0x2000, scoped, tag = 'input window, operand 1']
    #allocation3 [shape = 's32[2]{0}', space=sflag, size = 0x8, scoped, tag = 'scoped memory for tpu_custom_call.1']
    #allocation4 [shape = 's32[2]{0}', space=sflag, size = 0x8, scoped, tag = 'scoped memory for tpu_custom_call.1']
    #allocation5 [shape = 'u8[8192]{0}', space=vmem, size = 0x2000, scoped, tag = 'output window, operand 0']
    %7 = vsyncpa [#allocation3], 0
    %s8 = scalar_lea.sflag [#allocation3], 1
    %9 = vsyncpa %s8, 0
    %10 = vsyncpa [#allocation4], 0
    %s11 = scalar_lea.sflag [#allocation4], 1
    %12 = vsyncpa %s11, 0
    loop: start=0, step=1, limit=4
    $region2: #{tpu_custom_call.1} parent=1 // loop_pre_header
      _
    $region3: #{tpu_custom_call.1} parent=1 // loop_header
      %s14 = sphi 0, %s18
      %p15 = scmp.ge.s32.totalorder %s14, 4
      %s21 = sphi 0, %s33
      %s22 = sphi 0, %s29
      %s23 = sphi 0, %s21
      %s24 = sphi 0, %s22
      %s25 = sphi 0, %s23
      %s26 = sphi 0, %s24
      %s34 = sphi 0, %s34
      %s36 = sphi 0, %s34
      %s37 = sphi 0, %s36
      %s51 = sphi 0, %s37
      %s59 = sphi 0, %s61
      %s62 = sphi 0, %s59
      %s63 = sphi 0, %s62
      %s79 = sphi 0, %s63
      %s87 = sphi 0, %s89
      %s90 = sphi 0, %s87
      %s91 = sphi 0, %s90
      %s107 = sphi 0, %s91
    $region4: #{tpu_custom_call.1} parent=1 // loop_header_branch
      %17 = sbr.rel (%p15) target = $region8
    $region5: #{tpu_custom_call.1} parent=1 // loop_body
      %s19 = ssub.s32 %s14, 1
      %s20 = ssub.s32 %s14, 2
      %s27 = sadd.s32 1, %s22
      %p28 = scmp.ge.s32.totalorder %s27, 2
      %s29 = scalar_select %p28, 0, %s27
      %s30 = sadd.s32 1, %s21
      %s31 = scalar_select %p28, %s30, %s21
      %p32 = scmp.ge.s32.totalorder %s31, 1
      %s33 = scalar_select %p32, 0, %s31
      %s35 = sadd.s32 %s34, 1
      %p38 = scmp.eq.s32.totalorder %s14, 1
      %p39 = scmp.ne.s32.totalorder %s34, %s36
      %p40 = scmp.eq.s32.totalorder %s14, 0
      %p41 = por %p39, %p40
      %p42 = scmp.ne.s32.totalorder %s34, %s36
      %p43 = scmp.eq.s32.totalorder %s19, 1
      %p44 = por %p42, %p43
      %p45 = scmp.ne.s32.totalorder %s36, %s37
      %p46 = scmp.eq.s32.totalorder %s19, 0
      %p47 = por %p45, %p46
      %p48 = scmp.ne.s32.totalorder %s36, %s37
      %p49 = scmp.eq.s32.totalorder %s20, 1
      %p50 = por %p48, %p49
      %p52 = scmp.ne.s32.totalorder %s37, %s51
      %p53 = scmp.eq.s32.totalorder %s20, 0
      %p54 = por %p52, %p53
      %s55 = ssub.s32 %s21, %s33
      %s56 = ssub.s32 %s22, %s29
      %s57 = sor.u32 %s55, %s56
      %p58 = scmp.eq.s32.totalorder %s57, 0
      %s60 = sadd.s32 %s59, 1
      %s61 = scalar_select %p58, %s59, %s60
      %p64 = pneg %p58
      %p65 = scmp.eq.s32.totalorder %s14, 1
      %p66 = por %p64, %p65
      %p67 = scmp.ne.s32.totalorder %s59, %s62
      %p68 = scmp.eq.s32.totalorder %s14, 0
      %p69 = por %p67, %p68
      %p70 = scmp.ne.s32.totalorder %s59, %s62
      %p71 = scmp.eq.s32.totalorder %s19, 1
      %p72 = por %p70, %p71
      %p73 = scmp.ne.s32.totalorder %s62, %s63
      %p74 = scmp.eq.s32.totalorder %s19, 0
      %p75 = por %p73, %p74
      %p76 = scmp.ne.s32.totalorder %s62, %s63
      %p77 = scmp.eq.s32.totalorder %s20, 1
      %p78 = por %p76, %p77
      %p80 = scmp.ne.s32.totalorder %s63, %s79
      %p81 = scmp.eq.s32.totalorder %s20, 0
      %p82 = por %p80, %p81
      %s83 = ssub.s32 %s21, %s33
      %s84 = ssub.s32 %s22, %s29
      %s85 = sor.u32 %s83, %s84
      %p86 = scmp.eq.s32.totalorder %s85, 0
      %s88 = sadd.s32 %s87, 1
      %s89 = scalar_select %p86, %s87, %s88
      %p92 = pneg %p86
      %p93 = scmp.eq.s32.totalorder %s14, 1
      %p94 = por %p92, %p93
      %p95 = scmp.ne.s32.totalorder %s87, %s90
      %p96 = scmp.eq.s32.totalorder %s14, 0
      %p97 = por %p95, %p96
      %p98 = scmp.ne.s32.totalorder %s87, %s90
      %p99 = scmp.eq.s32.totalorder %s19, 1
      %p100 = por %p98, %p99
      %p101 = scmp.ne.s32.totalorder %s90, %s91
      %p102 = scmp.eq.s32.totalorder %s19, 0
      %p103 = por %p101, %p102
      %p104 = scmp.ne.s32.totalorder %s90, %s91
      %p105 = scmp.eq.s32.totalorder %s20, 1
      %p106 = por %p104, %p105
      %p108 = scmp.ne.s32.totalorder %s91, %s107
      %p109 = scmp.eq.s32.totalorder %s20, 0
      %p110 = por %p108, %p109
      %p111 = scmp.le.s32.totalorder 1, %s14
      %p112 = scmp.lt.s32.totalorder %s14, 3
      %p113 = pnand %p111, %p112
      %p114 = pneg %p113
      // Predicated region
      $region9: #{tpu_custom_call.1} parent=5 // pred_check
        _
      $region10: #{tpu_custom_call.1} parent=5 // pred_check_branch
        %116 = sbr.rel (%p113) target = $region12
      $region11: #{tpu_custom_call.1} parent=5 // pred_region
        %s117 = ssub.s32 %s14, 1
        // Predicated region
        $region13: #{tpu_custom_call.1} parent=11 // pred_check
          %p118 = pneg %p47
        $region14: #{tpu_custom_call.1} parent=11 // pred_check_branch
          %120 = sbr.rel (%p118) target = $region16
        $region15: #{tpu_custom_call.1} parent=11 // pred_region
          _
        $region16: #{tpu_custom_call.1} parent=11 // pred_fallthru
          _
      $region12: #{tpu_custom_call.1} parent=5 // pred_fallthru
        _
      %p121 = scmp.lt.s32.totalorder %s14, 2
      // Predicated region
      $region17: #{tpu_custom_call.1} parent=5 // pred_check
        %p122 = pneg %p121
      $region18: #{tpu_custom_call.1} parent=5 // pred_check_branch
        %124 = sbr.rel (%p122) target = $region20
      $region19: #{tpu_custom_call.1} parent=5 // pred_region
        // Predicated region
        $region21: #{tpu_custom_call.1} parent=19 // pred_check
          %p125 = pneg %p69
        $region22: #{tpu_custom_call.1} parent=19 // pred_check_branch
          %127 = sbr.rel (%p125) target = $region24
        $region23: #{tpu_custom_call.1} parent=19 // pred_region
          %s128 = sand.u32 %s59, 1
          %s129 = scalar_lea.sflag [#allocation3], %s128
          %s130 = sand.u32 %s59, 1
          %s131 = smul.addr %s130, 8
          %s132 = scalar_lea.vmem [#allocation2], %s131
          %s134 = ssub.s32 128, 128
          %135 = vsyncadd %s129, %s134
          %s136 = smul.addr %s21, 2
          %s137 = sadd.s32 %s22, %s136
          %s138 = smul.addr %s137, 128
          %s139 = scalar_lea.hbm %s1, %s138
          %s141 = sshll.u32 %s132, 4
          %s142 = int_to_ptr.vmem [resolvable:$true] %s141
          %144 = dma.hbm_to_vmem [thread:$0]  %s139, 128, %s142, %s129
        $region24: #{tpu_custom_call.1} parent=19 // pred_fallthru
          _
      $region20: #{tpu_custom_call.1} parent=5 // pred_fallthru
        _
      %p145 = scmp.le.s32.totalorder 1, %s14
      %p146 = scmp.lt.s32.totalorder %s14, 3
      %p147 = pnand %p145, %p146
      %p148 = pneg %p147
      // Predicated region
      $region25: #{tpu_custom_call.1} parent=5 // pred_check
        _
      $region26: #{tpu_custom_call.1} parent=5 // pred_check_branch
        %150 = sbr.rel (%p147) target = $region28
      $region27: #{tpu_custom_call.1} parent=5 // pred_region
        %s151 = ssub.s32 %s14, 1
        %s152 = sand.u32 %s62, 1
        %s153 = scalar_lea.sflag [#allocation3], %s152
        %s154 = sand.u32 %s62, 1
        %s155 = smul.addr %s154, 8
        %s156 = scalar_lea.vmem [#allocation2], %s155
        // Predicated region
        $region29: #{tpu_custom_call.1} parent=27 // pred_check
          %p157 = pneg %p75
        $region30: #{tpu_custom_call.1} parent=27 // pred_check_branch
          %159 = sbr.rel (%p157) target = $region32
        $region31: #{tpu_custom_call.1} parent=27 // pred_region
          %160 = dma.done %s153, 128
        $region32: #{tpu_custom_call.1} parent=27 // pred_fallthru
          _
        %p161 = pneg %p47
        %p162 = pneg %p44
        %s163 = sand.u32 %s62, 1
        %s164 = scalar_lea.sflag [#allocation3], %s163
        %s165 = sand.u32 %s62, 1
        %s166 = smul.addr %s165, 8
        %s167 = scalar_lea.vmem [#allocation2], %s166
        %p168 = pneg %p75
        %p169 = pneg %p72
        %p170 = pneg %p103
        %p171 = pneg %p100
        %s172 = sand.u32 %s90, 1
        %s173 = scalar_lea.sflag [#allocation4], %s172
        %s174 = sand.u32 %s90, 1
        %s175 = smul.addr %s174, 8
        %s176 = scalar_lea.vmem [#allocation5], %s175
        %s177 = smul.u32 %s23, 8
        %s178 = scalar_lea.vmem %s0, %s177
        %v179 = vld [vmem:[%s178] sm:$0xff]
        %v180 = vld [vmem:[%s156] sm:$0xff]
        %182 = vset.pattern.permute.xlu0 0
        %183 = vperm.xlu0 %182, %v179
        %v184 = vpop.permute.xlu0 %183
        %v186 = vmul.f32 %v180, %v184
        %187 = vset.pattern.permute.xlu0 1
        %188 = vperm.xlu0 %187, %v179
        %v189 = vpop.permute.xlu0 %188
        %v191 = vadd.f32 %v186, %v189
        %192 = vst [vmem:[%s176] sm:$0xff] %v191
        %s193 = sand.u32 %s90, 1
        %s194 = scalar_lea.sflag [#allocation4], %s193
        %s195 = sand.u32 %s90, 1
        %s196 = smul.addr %s195, 8
        %s197 = scalar_lea.vmem [#allocation5], %s196
        // Predicated region
        $region33: #{tpu_custom_call.1} parent=27 // pred_check
          %p198 = pneg %p100
        $region34: #{tpu_custom_call.1} parent=27 // pred_check_branch
          %200 = sbr.rel (%p198) target = $region36
        $region35: #{tpu_custom_call.1} parent=27 // pred_region
          %s202 = ssub.s32 128, 128
          %203 = vsyncadd %s194, %s202
          %s204 = smul.addr %s23, 2
          %s205 = sadd.s32 %s24, %s204
          %s206 = smul.addr %s205, 128
          %s207 = scalar_lea.hbm %s2, %s206
          %s209 = sshll.u32 %s197, 4
          %s210 = int_to_ptr.vmem [resolvable:$true] %s209
          %212 = dma.vmem_to_hbm [thread:$0]  %s210, 128, %s207, %s194
        $region36: #{tpu_custom_call.1} parent=27 // pred_fallthru
          _
      $region28: #{tpu_custom_call.1} parent=5 // pred_fallthru
        _
      %p213 = scmp.le.s32.totalorder 2, %s14
      // Predicated region
      $region37: #{tpu_custom_call.1} parent=5 // pred_check
        %p214 = pneg %p213
      $region38: #{tpu_custom_call.1} parent=5 // pred_check_branch
        %216 = sbr.rel (%p214) target = $region40
      $region39: #{tpu_custom_call.1} parent=5 // pred_region
        %s217 = ssub.s32 %s14, 2
        // Predicated region
        $region41: #{tpu_custom_call.1} parent=39 // pred_check
          %p218 = pneg %p106
        $region42: #{tpu_custom_call.1} parent=39 // pred_check_branch
          %220 = sbr.rel (%p218) target = $region44
        $region43: #{tpu_custom_call.1} parent=39 // pred_region
          %s221 = sand.u32 %s91, 1
          %s222 = scalar_lea.sflag [#allocation4], %s221
          %s223 = sand.u32 %s91, 1
          %s224 = smul.addr %s223, 8
          %s225 = scalar_lea.vmem [#allocation5], %s224
          %226 = dma.done %s222, 128
        $region44: #{tpu_custom_call.1} parent=39 // pred_fallthru
          _
      $region40: #{tpu_custom_call.1} parent=5 // pred_fallthru
        _
    $region6: #{tpu_custom_call.1} parent=1 // loop_footer
      %s18 = sadd.s32 1, %s14
    $region7: #{tpu_custom_call.1} parent=1 // loop_footer_branch
      %13 = sbr.rel target = $region3
    $region8: #{tpu_custom_call.1} parent=1 // loop_exit
      _
    %227 = vsyncpa [#allocation3], 1
    %s228 = scalar_lea.sflag [#allocation3], 1
    %229 = vsyncpa %s228, 1
    %230 = vsyncpa [#allocation4], 1
    %s231 = scalar_lea.sflag [#allocation4], 1
    %232 = vsyncpa %s231, 1

</llo_original>
